<compile_context>
chip_gen: v6e
topology: v6e:2x2x1
jax: 0.10.0
libtpu: 0.0.40
codegen_flags: <defaults>
</compile_context>

<pallas_src>
import math
import functools

import jax
import jax.numpy as jnp
from jax import lax
from jax.experimental import pallas as pl
from jax.experimental.pallas import tpu as pltpu


def _pick_tile(dim, desired, align):
    """Largest `align`-multiple tile <= desired that evenly divides dim.

    Falls back to the full extent (always a legal block size) if nothing
    aligned divides evenly.
    # TODO(synk): pad + mask instead of the full-extent fallback for awkward
    # (non-divisible) dims, which can otherwise request an entire-axis block.
    """
    if dim <= desired:
        return dim
    t = (desired // align) * align
    while t >= align:
        if dim % t == 0:
            return t
        t -= align
    return dim


# ----------------------------- fused linear kernel -------------------------- #

def _fused_linear_kernel(*refs, n):
    # refs = x_0..x_{n-1}, w_0.., b_0.., o_0.., acc_0..
    x_refs = refs[0:n]
    w_refs = refs[n:2 * n]
    b_refs = refs[2 * n:3 * n]
    o_refs = refs[3 * n:4 * n]
    acc_refs = refs[4 * n:5 * n]

    @pl.when(pl.program_id(2) == 0)
    def _init():
        for acc in acc_refs:
            acc[...] = jnp.zeros_like(acc)

    for x, w, acc in zip(x_refs, w_refs, acc_refs):
        acc[...] += jnp.dot(x[...], w[...], preferred_element_type=jnp.float32)

    @pl.when(pl.program_id(2) == pl.num_programs(2) - 1)
    def _finalize():
        for o, b, acc in zip(o_refs, b_refs, acc_refs):
            o[...] = (acc[...] + b[...].astype(jnp.float32)).astype(o.dtype)


def fused_linear(xs, ws, bs, *, tm=256, tk=512, vmem_budget=24 << 20):
    """y[i] = xs[i] @ ws[i] + bs[i] for all i, fused in ONE pallas_call.

    xs[i]: (M, Din), ws[i]: (Din, Dout), bs[i]: (1, Dout).  n=3 fuses the
    Q/K/V projections (distinct activation inputs, no HBM stacking); n=1 is
    the output projection.
    """
    n = len(xs)
    M, Din = xs[0].shape
    Dout = ws[0].shape[1]
    item = jnp.dtype(xs[0].dtype).itemsize

    tm = _pick_tile(M, tm, 8)
    tk = _pick_tile(Din, tk, 128)

    def need(tn_):
        # double-buffered x/w/b/o blocks + f32 accumulator, per projection.
        per = (tm * tk + tk * tn_ + tn_ + tm * tn_) * item * 2 + tm * tn_ * 4
        return n * per

    # Prefer tn == Dout (each x block DMAed exactly once); shrink if over budget.
    tn = _pick_tile(Dout, Dout, 128)
    for cand in (Dout, 1024, 512, 256, 128):
        if cand > Dout:
            continue
        tn = _pick_tile(Dout, cand, 128)
        if need(tn) <= vmem_budget:
            break

    grid = (M // tm, Dout // tn, Din // tk)
    vmem_limit = int(min(max(need(tn) + (8 << 20), 16 << 20), 48 << 20))

    x_spec = pl.BlockSpec((tm, tk), lambda i, j, k: (i, k))
    w_spec = pl.BlockSpec((tk, tn), lambda i, j, k: (k, j))
    b_spec = pl.BlockSpec((1, tn), lambda i, j, k: (0, j))
    o_spec = pl.BlockSpec((tm, tn), lambda i, j, k: (i, j))

    outs = pl.pallas_call(
        functools.partial(_fused_linear_kernel, n=n),
        out_shape=tuple(jax.ShapeDtypeStruct((M, Dout), x.dtype) for x in xs),
        grid_spec=pltpu.PrefetchScalarGridSpec(
            num_scalar_prefetch=0,
            grid=grid,
            in_specs=[x_spec] * n + [w_spec] * n + [b_spec] * n,
            out_specs=[o_spec] * n,
            scratch_shapes=[pltpu.VMEM((tm, tn), jnp.float32)] * n,
        ),
        compiler_params=pltpu.CompilerParams(
            dimension_semantics=("parallel", "parallel", "arbitrary"),
            vmem_limit_bytes=vmem_limit),
    )(*xs, *ws, *bs)
    return tuple(outs)


# ------------------------- flash multi-head attention ----------------------- #

def _flash_mha_kernel(q_ref, k_ref, v_ref, o_ref, m_ref, l_ref, acc_ref, *,
                      n_head, head_dim):
    # Grid: (batch, q-tiles, kv-tiles); kv axis is the (arbitrary) reduction.
    kv_idx = pl.program_id(2)

    @pl.when(kv_idx == 0)
    def _init():
        m_ref[...] = jnp.full_like(m_ref, -jnp.inf)
        l_ref[...] = jnp.zeros_like(l_ref)
        acc_ref[...] = jnp.zeros_like(acc_ref)

    # Lane-dense (tq, D) / (tkv, D) blocks, native dtype end-to-end.
    # The 1/sqrt(head_dim) scale is folded into the Q projection weights.
    q_all = q_ref[0]
    k_all = k_ref[0]
    v_all = v_ref[0]
    tq = q_all.shape[0]

    # TODO(synk): the optional causal (tril) mask branch of the PyTorch module
    # is not implemented; forward() is exercised with mask=None.

    scales = []
    deltas = []
    for h in range(n_head):                         # static unrolled head loop
        lo = h * head_dim
        q_h = q_all[:, lo:lo + head_dim]            # (tq, Dh)
        k_h = k_all[:, lo:lo + head_dim]            # (tkv, Dh)
        v_h = v_all[:, lo:lo + head_dim]            # (tkv, Dh)

        # q @ k^T: contract last dims, native dtype in / f32 accumulate.
        s = lax.dot_general(q_h, k_h, (((1,), (1,)), ((), ())),
                            preferred_element_type=jnp.float32)   # (tq, tkv)

        m_prev = m_ref[h]                                          # (tq, 1)
        m_new = jnp.maximum(m_prev, jnp.max(s, axis=-1, keepdims=True))
        alpha = jnp.exp(m_prev - m_new)
        p = jnp.exp(s - m_new)                                     # (tq, tkv)

        l_ref[h] = alpha * l_ref[h] + jnp.sum(p, axis=-1, keepdims=True)
        m_ref[h] = m_new

        scales.append(jnp.broadcast_to(alpha, (tq, head_dim)))
        deltas.append(jnp.dot(p.astype(v_h.dtype), v_h,
                              preferred_element_type=jnp.float32))

    if n_head == 1:
        scale_full, delta_full = scales[0], deltas[0]
    else:
        scale_full = jnp.concatenate(scales, axis=-1)              # (tq, D)
        delta_full = jnp.concatenate(deltas, axis=-1)              # (tq, D)
    # Single lane-dense (tq, D) accumulator read-modify-write per kv step.
    acc_ref[...] = scale_full * acc_ref[...] + delta_full

    @pl.when(kv_idx == pl.num_programs(2) - 1)
    def _finalize():
        # Exact reciprocal: runs once per q tile, essentially free.
        if n_head == 1:
            inv = jnp.broadcast_to(1.0 / l_ref[0], (tq, head_dim))
        else:
            inv = jnp.concatenate(
                [jnp.broadcast_to(1.0 / l_ref[h], (tq, head_dim))
                 for h in range(n_head)], axis=-1)
        # One full-width lane-dense store of the (tq, D) output tile.
        o_ref[0] = (acc_ref[...] * inv).astype(o_ref.dtype)


def attention(q_btd, k_btd, v_btd, n_head, *, vmem_budget=24 << 20):
    """Flash-style multi-head attention over (B, T, D) inputs (heads packed in D)."""
    B, T, D = q_btd.shape
    head_dim = D // n_head
    item = jnp.dtype(q_btd.dtype).itemsize

    # VMEM-budget-driven tiles: double-buffered q/k/v/o blocks + f32 (tq,D) acc.
    tq = tkv = T
    for cand_q, cand_kv in ((512, 512), (256, 512), (256, 256), (128, 256),
                            (128, 128), (64, 128), (64, 64), (32, 32),
                            (16, 16), (8, 8)):
        tq = _pick_tile(T, cand_q, 8)
        tkv = _pick_tile(T, cand_kv, 8)
        need = 2 * (2 * tq * D + 2 * tkv * D) * item + tq * D * 4
        if need <= vmem_budget:
            break
    need = 2 * (2 * tq * D + 2 * tkv * D) * item + tq * D * 4
    vmem_limit = int(min(max(need + (8 << 20), 16 << 20), 48 << 20))

    grid = (B, T // tq, T // tkv)
    kernel = functools.partial(_flash_mha_kernel, n_head=n_head,
                               head_dim=head_dim)

    q_spec = pl.BlockSpec((1, tq, D), lambda b, qi, ki: (b, qi, 0))
    kv_spec = pl.BlockSpec((1, tkv, D), lambda b, qi, ki: (b, ki, 0))

    return pl.pallas_call(
        kernel,
        out_shape=jax.ShapeDtypeStruct((B, T, D), q_btd.dtype),
        grid_spec=pltpu.PrefetchScalarGridSpec(
            num_scalar_prefetch=0,
            grid=grid,
            in_specs=[q_spec, kv_spec, kv_spec],
            out_specs=pl.BlockSpec((1, tq, D), lambda b, qi, ki: (b, qi, 0)),
            scratch_shapes=[
                pltpu.VMEM((n_head, tq, 1), jnp.float32),   # running max
                pltpu.VMEM((n_head, tq, 1), jnp.float32),   # running denom
                pltpu.VMEM((tq, D), jnp.float32),           # lane-dense acc
            ],
        ),
        compiler_params=pltpu.CompilerParams(
            dimension_semantics=("parallel", "parallel", "arbitrary"),
            vmem_limit_bytes=vmem_limit),
    )(q_btd, k_btd, v_btd)


# ------------------------------ module wrapper ------------------------------ #

def init_params(key, d_model):
    """Deterministic parameter init (PyTorch-Linear-like uniform)."""
    keys = jax.random.split(key, 8)
    bound = 1.0 / math.sqrt(d_model)

    def u(k, shape):
        return jax.random.uniform(k, shape, jnp.float32, -bound, bound)

    # Weights stored as (in, out) so that y = x @ W + b (== PyTorch x @ W_pt.T + b).
    return {
        "w_q": u(keys[0], (d_model, d_model)), "b_q": u(keys[1], (d_model,)),
        "w_k": u(keys[2], (d_model, d_model)), "b_k": u(keys[3], (d_model,)),
        "w_v": u(keys[4], (d_model, d_model)), "b_v": u(keys[5], (d_model,)),
        "w_c": u(keys[6], (d_model, d_model)), "b_c": u(keys[7], (d_model,)),
    }


def multi_head_attention(params, q, k, v, n_head):
    B, T, D = q.shape
    M = B * T
    head_dim = D // n_head
    scale = 1.0 / math.sqrt(head_dim)

    # Fold the attention scale into the Q projection (a D*D-element rescale,
    # negligible) so the attention kernel never touches it.
    w_q = params["w_q"] * scale
    b_q = params["b_q"] * scale

    qf, kf, vf = q.reshape(M, D), k.reshape(M, D), v.reshape(M, D)
    qp, kp, vp = fused_linear(
        (qf, kf, vf),
        (w_q, params["w_k"], params["w_v"]),
        (b_q.reshape(1, D), params["b_k"].reshape(1, D),
         params["b_v"].reshape(1, D)))

    ctx = attention(qp.reshape(B, T, D), kp.reshape(B, T, D),
                    vp.reshape(B, T, D), n_head)             # (B, T, D)

    (out,) = fused_linear((ctx.reshape(M, D),),
                          (params["w_c"],),
                          (params["b_c"].reshape(1, D),))
    return out.reshape(B, T, D)


# ---------------------------- pure-JAX reference ---------------------------- #

def _reference(params, q, k, v, n_head):
    B, T, D = q.shape
    n_d = D // n_head
    qp = q @ params["w_q"] + params["b_q"]
    kp = k @ params["w_k"] + params["b_k"]
    vp = v @ params["w_v"] + params["b_v"]

    def split(x):
        return x.reshape(B, T, n_head, n_d).transpose(0, 2, 1, 3)

    qh, kh, vh = split(qp), split(kp), split(vp)
    s = jnp.einsum("bhtd,bhsd->bhts", qh, kh) / math.sqrt(n_d)
    p = jax.nn.softmax(s, axis=-1)
    ctx = jnp.einsum("bhts,bhsd->bhtd", p, vh)
    ctx = ctx.transpose(0, 2, 1, 3).reshape(B, T, D)
    return ctx @ params["w_c"] + params["b_c"]


if __name__ == "__main__":
    B, T, D, H = 2, 8, 32, 4

    key = jax.random.PRNGKey(0)
    kq, kk, kv, kp = jax.random.split(key, 4)
    q = jax.random.normal(kq, (B, T, D), jnp.float32)
    k = jax.random.normal(kk, (B, T, D), jnp.float32)
    v = jax.random.normal(kv, (B, T, D), jnp.float32)
    params = init_params(kp, D)

    out = multi_head_attention(params, q, k, v, H)
    out = jax.block_until_ready(out)

    ref = _reference(params, q, k, v, H)
    assert out.shape == (B, T, D)
    assert jnp.allclose(out, ref, atol=1e-3, rtol=1e-3)

    print("KERNEL_OK")
</pallas_src>

<mosaic_0001>
module attributes {stable_mosaic.version = 11 : i64} {
  func.func @_fused_linear_kernel(%arg0: i32, %arg1: i32, %arg2: i32, %arg3: memref<16x32xf32, #tpu.memory_space<vmem>>, %arg4: memref<16x32xf32, #tpu.memory_space<vmem>>, %arg5: memref<16x32xf32, #tpu.memory_space<vmem>>, %arg6: memref<32x32xf32, #tpu.memory_space<vmem>>, %arg7: memref<32x32xf32, #tpu.memory_space<vmem>>, %arg8: memref<32x32xf32, #tpu.memory_space<vmem>>, %arg9: memref<1x32xf32, #tpu.memory_space<vmem>>, %arg10: memref<1x32xf32, #tpu.memory_space<vmem>>, %arg11: memref<1x32xf32, #tpu.memory_space<vmem>>, %arg12: memref<16x32xf32, #tpu.memory_space<vmem>>, %arg13: memref<16x32xf32, #tpu.memory_space<vmem>>, %arg14: memref<16x32xf32, #tpu.memory_space<vmem>>, %arg15: memref<16x32xf32, #tpu.memory_space<vmem>>, %arg16: memref<16x32xf32, #tpu.memory_space<vmem>>, %arg17: memref<16x32xf32, #tpu.memory_space<vmem>>) attributes {dimension_semantics = [#tpu.dimension_semantics<parallel>, #tpu.dimension_semantics<parallel>, #tpu.dimension_semantics<arbitrary>], iteration_bounds = array<i64: 1, 1, 1>, scalar_prefetch = 0 : i64, scratch_operands = 3 : i64, tpu.core_type = #tpu.core_type<tc>, window_params = [{transform_indices = @transform_0, window_bounds = array<i64: 16, 32>}, {transform_indices = @transform_1, window_bounds = array<i64: 16, 32>}, {transform_indices = @transform_2, window_bounds = array<i64: 16, 32>}, {transform_indices = @transform_3, window_bounds = array<i64: 32, 32>}, {transform_indices = @transform_4, window_bounds = array<i64: 32, 32>}, {transform_indices = @transform_5, window_bounds = array<i64: 32, 32>}, {transform_indices = @transform_6, window_bounds = array<i64: 1, 32>}, {transform_indices = @transform_7, window_bounds = array<i64: 1, 32>}, {transform_indices = @transform_8, window_bounds = array<i64: 1, 32>}, {transform_indices = @transform_9, window_bounds = array<i64: 16, 32>}, {transform_indices = @transform_10, window_bounds = array<i64: 16, 32>}, {transform_indices = @transform_11, window_bounds = array<i64: 16, 32>}]} {
    %c0_i32 = arith.constant 0 : i32
    %0 = arith.cmpi eq, %arg2, %c0_i32 : i32
    %1 = arith.extui %0 : i1 to i32
    %c0_i32_0 = arith.constant 0 : i32
    %2 = arith.cmpi ne, %1, %c0_i32_0 : i32
    scf.if %2 {
      %cst_28 = arith.constant 0.000000e+00 : f32
      %24 = vector.broadcast %cst_28 : f32 to vector<16x32xf32>
      %c0_29 = arith.constant 0 : index
      %c0_30 = arith.constant 0 : index
      %25 = vector.load %arg15[%c0_29, %c0_30] : memref<16x32xf32, #tpu.memory_space<vmem>>, vector<16x32xf32>
      tpu.vector_store %arg15[%c0_29, %c0_30], %24 {strides = array<i32>} : memref<16x32xf32, #tpu.memory_space<vmem>>, vector<16x32xf32>,
      %cst_31 = arith.constant 0.000000e+00 : f32
      %26 = vector.broadcast %cst_31 : f32 to vector<16x32xf32>
      %c0_32 = arith.constant 0 : index
      %c0_33 = arith.constant 0 : index
      %27 = vector.load %arg16[%c0_32, %c0_33] : memref<16x32xf32, #tpu.memory_space<vmem>>, vector<16x32xf32>
      tpu.vector_store %arg16[%c0_32, %c0_33], %26 {strides = array<i32>} : memref<16x32xf32, #tpu.memory_space<vmem>>, vector<16x32xf32>,
      %cst_34 = arith.constant 0.000000e+00 : f32
      %28 = vector.broadcast %cst_34 : f32 to vector<16x32xf32>
      %c0_35 = arith.constant 0 : index
      %c0_36 = arith.constant 0 : index
      %29 = vector.load %arg17[%c0_35, %c0_36] : memref<16x32xf32, #tpu.memory_space<vmem>>, vector<16x32xf32>
      tpu.vector_store %arg17[%c0_35, %c0_36], %28 {strides = array<i32>} : memref<16x32xf32, #tpu.memory_space<vmem>>, vector<16x32xf32>,
    } else {
    }
    %c0 = arith.constant 0 : index
    %c0_1 = arith.constant 0 : index
    %3 = vector.load %arg15[%c0, %c0_1] : memref<16x32xf32, #tpu.memory_space<vmem>>, vector<16x32xf32>
    %c0_2 = arith.constant 0 : index
    %c0_3 = arith.constant 0 : index
    %4 = vector.load %arg3[%c0_2, %c0_3] : memref<16x32xf32, #tpu.memory_space<vmem>>, vector<16x32xf32>
    %c0_4 = arith.constant 0 : index
    %c0_5 = arith.constant 0 : index
    %5 = vector.load %arg6[%c0_4, %c0_5] : memref<32x32xf32, #tpu.memory_space<vmem>>, vector<32x32xf32>
    %cst = arith.constant dense<0.000000e+00> : vector<16x32xf32>
    %6 = tpu.matmul %4, %5, %cst {dimension_numbers = #tpu.dot_dimension_numbers<[1], [0], [0], [1], [0, 0, 1, 1], [], []>} : vector<16x32xf32>, vector<32x32xf32>, vector<16x32xf32> -> vector<16x32xf32>
    %7 = arith.addf %3, %6 : vector<16x32xf32>
    %c0_6 = arith.constant 0 : index
    %c0_7 = arith.constant 0 : index
    %8 = vector.load %arg15[%c0_6, %c0_7] : memref<16x32xf32, #tpu.memory_space<vmem>>, vector<16x32xf32>
    tpu.vector_store %arg15[%c0_6, %c0_7], %7 {strides = array<i32>} : memref<16x32xf32, #tpu.memory_space<vmem>>, vector<16x32xf32>,
    %c0_8 = arith.constant 0 : index
    %c0_9 = arith.constant 0 : index
    %9 = vector.load %arg16[%c0_8, %c0_9] : memref<16x32xf32, #tpu.memory_space<vmem>>, vector<16x32xf32>
    %c0_10 = arith.constant 0 : index
    %c0_11 = arith.constant 0 : index
    %10 = vector.load %arg4[%c0_10, %c0_11] : memref<16x32xf32, #tpu.memory_space<vmem>>, vector<16x32xf32>
    %c0_12 = arith.constant 0 : index
    %c0_13 = arith.constant 0 : index
    %11 = vector.load %arg7[%c0_12, %c0_13] : memref<32x32xf32, #tpu.memory_space<vmem>>, vector<32x32xf32>
    %cst_14 = arith.constant dense<0.000000e+00> : vector<16x32xf32>
    %12 = tpu.matmul %10, %11, %cst_14 {dimension_numbers = #tpu.dot_dimension_numbers<[1], [0], [0], [1], [0, 0, 1, 1], [], []>} : vector<16x32xf32>, vector<32x32xf32>, vector<16x32xf32> -> vector<16x32xf32>
    %13 = arith.addf %9, %12 : vector<16x32xf32>
    %c0_15 = arith.constant 0 : index
    %c0_16 = arith.constant 0 : index
    %14 = vector.load %arg16[%c0_15, %c0_16] : memref<16x32xf32, #tpu.memory_space<vmem>>, vector<16x32xf32>
    tpu.vector_store %arg16[%c0_15, %c0_16], %13 {strides = array<i32>} : memref<16x32xf32, #tpu.memory_space<vmem>>, vector<16x32xf32>,
    %c0_17 = arith.constant 0 : index
    %c0_18 = arith.constant 0 : index
    %15 = vector.load %arg17[%c0_17, %c0_18] : memref<16x32xf32, #tpu.memory_space<vmem>>, vector<16x32xf32>
    %c0_19 = arith.constant 0 : index
    %c0_20 = arith.constant 0 : index
    %16 = vector.load %arg5[%c0_19, %c0_20] : memref<16x32xf32, #tpu.memory_space<vmem>>, vector<16x32xf32>
    %c0_21 = arith.constant 0 : index
    %c0_22 = arith.constant 0 : index
    %17 = vector.load %arg8[%c0_21, %c0_22] : memref<32x32xf32, #tpu.memory_space<vmem>>, vector<32x32xf32>
    %cst_23 = arith.constant dense<0.000000e+00> : vector<16x32xf32>
    %18 = tpu.matmul %16, %17, %cst_23 {dimension_numbers = #tpu.dot_dimension_numbers<[1], [0], [0], [1], [0, 0, 1, 1], [], []>} : vector<16x32xf32>, vector<32x32xf32>, vector<16x32xf32> -> vector<16x32xf32>
    %19 = arith.addf %15, %18 : vector<16x32xf32>
    %c0_24 = arith.constant 0 : index
    %c0_25 = arith.constant 0 : index
    %20 = vector.load %arg17[%c0_24, %c0_25] : memref<16x32xf32, #tpu.memory_space<vmem>>, vector<16x32xf32>
    tpu.vector_store %arg17[%c0_24, %c0_25], %19 {strides = array<i32>} : memref<16x32xf32, #tpu.memory_space<vmem>>, vector<16x32xf32>,
    %c0_i32_26 = arith.constant 0 : i32
    %21 = arith.cmpi eq, %arg2, %c0_i32_26 : i32
    %22 = arith.extui %21 : i1 to i32
    %c0_i32_27 = arith.constant 0 : i32
    %23 = arith.cmpi ne, %22, %c0_i32_27 : i32
    scf.if %23 {
      %c0_28 = arith.constant 0 : index
      %c0_29 = arith.constant 0 : index
      %24 = vector.load %arg15[%c0_28, %c0_29] : memref<16x32xf32, #tpu.memory_space<vmem>>, vector<16x32xf32>
      %c0_30 = arith.constant 0 : index
      %c0_31 = arith.constant 0 : index
      %25 = vector.load %arg9[%c0_30, %c0_31] : memref<1x32xf32, #tpu.memory_space<vmem>>, vector<1x32xf32>
      %26 = vector.broadcast %25 : vector<1x32xf32> to vector<16x32xf32>
      %27 = arith.addf %24, %26 : vector<16x32xf32>
      %c0_32 = arith.constant 0 : index
      %c0_33 = arith.constant 0 : index
      %28 = vector.load %arg12[%c0_32, %c0_33] : memref<16x32xf32, #tpu.memory_space<vmem>>, vector<16x32xf32>
      tpu.vector_store %arg12[%c0_32, %c0_33], %27 {strides = array<i32>} : memref<16x32xf32, #tpu.memory_space<vmem>>, vector<16x32xf32>,
      %c0_34 = arith.constant 0 : index
      %c0_35 = arith.constant 0 : index
      %29 = vector.load %arg16[%c0_34, %c0_35] : memref<16x32xf32, #tpu.memory_space<vmem>>, vector<16x32xf32>
      %c0_36 = arith.constant 0 : index
      %c0_37 = arith.constant 0 : index
      %30 = vector.load %arg10[%c0_36, %c0_37] : memref<1x32xf32, #tpu.memory_space<vmem>>, vector<1x32xf32>
      %31 = vector.broadcast %30 : vector<1x32xf32> to vector<16x32xf32>
      %32 = arith.addf %29, %31 : vector<16x32xf32>
      %c0_38 = arith.constant 0 : index
      %c0_39 = arith.constant 0 : index
      %33 = vector.load %arg13[%c0_38, %c0_39] : memref<16x32xf32, #tpu.memory_space<vmem>>, vector<16x32xf32>
      tpu.vector_store %arg13[%c0_38, %c0_39], %32 {strides = array<i32>} : memref<16x32xf32, #tpu.memory_space<vmem>>, vector<16x32xf32>,
      %c0_40 = arith.constant 0 : index
      %c0_41 = arith.constant 0 : index
      %34 = vector.load %arg17[%c0_40, %c0_41] : memref<16x32xf32, #tpu.memory_space<vmem>>, vector<16x32xf32>
      %c0_42 = arith.constant 0 : index
      %c0_43 = arith.constant 0 : index
      %35 = vector.load %arg11[%c0_42, %c0_43] : memref<1x32xf32, #tpu.memory_space<vmem>>, vector<1x32xf32>
      %36 = vector.broadcast %35 : vector<1x32xf32> to vector<16x32xf32>
      %37 = arith.addf %34, %36 : vector<16x32xf32>
      %c0_44 = arith.constant 0 : index
      %c0_45 = arith.constant 0 : index
      %38 = vector.load %arg14[%c0_44, %c0_45] : memref<16x32xf32, #tpu.memory_space<vmem>>, vector<16x32xf32>
      tpu.vector_store %arg14[%c0_44, %c0_45], %37 {strides = array<i32>} : memref<16x32xf32, #tpu.memory_space<vmem>>, vector<16x32xf32>,
    } else {
    }
    return
  }
  func.func @transform_0(%arg0: i32, %arg1: i32, %arg2: i32) -> (i32, i32) {
    %c0_i32 = arith.constant 0 : i32
    return %arg0, %arg2 : i32, i32
  }
  func.func @transform_1(%arg0: i32, %arg1: i32, %arg2: i32) -> (i32, i32) {
    %c0_i32 = arith.constant 0 : i32
    return %arg0, %arg2 : i32, i32
  }
  func.func @transform_2(%arg0: i32, %arg1: i32, %arg2: i32) -> (i32, i32) {
    %c0_i32 = arith.constant 0 : i32
    return %arg0, %arg2 : i32, i32
  }
  func.func @transform_3(%arg0: i32, %arg1: i32, %arg2: i32) -> (i32, i32) {
    %c0_i32 = arith.constant 0 : i32
    return %arg2, %arg1 : i32, i32
  }
  func.func @transform_4(%arg0: i32, %arg1: i32, %arg2: i32) -> (i32, i32) {
    %c0_i32 = arith.constant 0 : i32
    return %arg2, %arg1 : i32, i32
  }
  func.func @transform_5(%arg0: i32, %arg1: i32, %arg2: i32) -> (i32, i32) {
    %c0_i32 = arith.constant 0 : i32
    return %arg2, %arg1 : i32, i32
  }
  func.func @transform_6(%arg0: i32, %arg1: i32, %arg2: i32) -> (i32, i32) {
    %c0_i32 = arith.constant 0 : i32
    %c0_i32_0 = arith.constant 0 : i32
    return %c0_i32, %arg1 : i32, i32
  }
  func.func @transform_7(%arg0: i32, %arg1: i32, %arg2: i32) -> (i32, i32) {
    %c0_i32 = arith.constant 0 : i32
    %c0_i32_0 = arith.constant 0 : i32
    return %c0_i32, %arg1 : i32, i32
  }
  func.func @transform_8(%arg0: i32, %arg1: i32, %arg2: i32) -> (i32, i32) {
    %c0_i32 = arith.constant 0 : i32
    %c0_i32_0 = arith.constant 0 : i32
    return %c0_i32, %arg1 : i32, i32
  }
  func.func @transform_9(%arg0: i32, %arg1: i32, %arg2: i32) -> (i32, i32) {
    %c0_i32 = arith.constant 0 : i32
    return %arg0, %arg1 : i32, i32
  }
  func.func @transform_10(%arg0: i32, %arg1: i32, %arg2: i32) -> (i32, i32) {
    %c0_i32 = arith.constant 0 : i32
    return %arg0, %arg1 : i32, i32
  }
  func.func @transform_11(%arg0: i32, %arg1: i32, %arg2: i32) -> (i32, i32) {
    %c0_i32 = arith.constant 0 : i32
    return %arg0, %arg1 : i32, i32
  }
}

</mosaic_0001>

<llo_original>
// kernel: tpu_custom_call.1
$region0: #{tpu_custom_call.1}
  #allocation0 [shape = 'u32[]', space=smem, size = 0x4, offset = 0x4, fixed_abs, tag = 'smem constant byte address 0x4 - core index']
  #allocation1 [shape = 'u32[144,128]{1,0:T(1,128)}', space=vmem, size = 0x12000, scoped, tag = 'internal scratch']
  #allocation2 [shape = 'f32[16,32]{1,0:T(8,128)}', space=vmem, size = 0x2000, scoped, tag = 'scratch operand']
  #allocation3 [shape = 'f32[16,32]{1,0:T(8,128)}', space=vmem, size = 0x2000, scoped, tag = 'scratch operand']
  #allocation4 [shape = 'f32[16,32]{1,0:T(8,128)}', space=vmem, size = 0x2000, scoped, tag = 'scratch operand']
  %s0 = inlined_call_operand.hbm [shape: f32[16,32], index: 0, kind: input, shape index: {}]
  %s1 = inlined_call_operand.hbm [shape: f32[16,32], index: 1, kind: input, shape index: {}]
  %s2 = inlined_call_operand.hbm [shape: f32[16,32], index: 2, kind: input, shape index: {}]
  %s3 = inlined_call_operand.hbm [shape: f32[32,32], index: 3, kind: input, shape index: {}]
  %s4 = inlined_call_operand.hbm [shape: f32[32,32], index: 4, kind: input, shape index: {}]
  %s5 = inlined_call_operand.hbm [shape: f32[32,32], index: 5, kind: input, shape index: {}]
  %s6 = inlined_call_operand.vmem [shape: f32[1,32], index: 6, kind: input, shape index: {}]
  %s7 = inlined_call_operand.vmem [shape: f32[1,32], index: 7, kind: input, shape index: {}]
  %s8 = inlined_call_operand.vmem [shape: f32[1,32], index: 8, kind: input, shape index: {}]
  %s9 = inlined_call_operand.hbm [shape: f32[16,32], index: 9, kind: output, shape index: {0}]
  %s10 = inlined_call_operand.hbm [shape: f32[16,32], index: 10, kind: output, shape index: {1}]
  %s11 = inlined_call_operand.hbm [shape: f32[16,32], index: 11, kind: output, shape index: {2}]
  %12 = xla_tuple %s9, %s10, %s11
  %s13 = sld [smem:[#allocation0]]
  $region94: #{tpu_custom_call.1} parent=0
    _
  %s15 = ssub.s32 1, %s13
  %s16 = scalar_select 0, %s15, %s13
  $region1: #{tpu_custom_call.1} parent=0
    #allocation5 [shape = 'u8[8192]{0}', space=vmem, size = 0x2000, scoped, tag = 'input window, operand 0, single buffered']
    #allocation6 [shape = 's32[1]{0}', space=sflag, size = 0x4, scoped, tag = 'scoped memory for tpu_custom_call.1']
    #allocation7 [shape = 's32[1]{0}', space=sflag, size = 0x4, scoped, tag = 'scoped memory for tpu_custom_call.1']
    #allocation8 [shape = 'u8[8192]{0}', space=vmem, size = 0x2000, scoped, tag = 'input window, operand 1, single buffered']
    #allocation9 [shape = 's32[1]{0}', space=sflag, size = 0x4, scoped, tag = 'scoped memory for tpu_custom_call.1']
    #allocation10 [shape = 'u8[8192]{0}', space=vmem, size = 0x2000, scoped, tag = 'input window, operand 2, single buffered']
    #allocation11 [shape = 'u8[16384]{0}', space=vmem, size = 0x4000, scoped, tag = 'input window, operand 3, single buffered']
    #allocation12 [shape = 's32[1]{0}', space=sflag, size = 0x4, scoped, tag = 'scoped memory for tpu_custom_call.1']
    #allocation13 [shape = 'u8[16384]{0}', space=vmem, size = 0x4000, scoped, tag = 'input window, operand 4, single buffered']
    #allocation14 [shape = 'u8[16384]{0}', space=vmem, size = 0x4000, scoped, tag = 'input window, operand 5, single buffered']
    #allocation15 [shape = 's32[1]{0}', space=sflag, size = 0x4, scoped, tag = 'scoped memory for tpu_custom_call.1']
    #allocation16 [shape = 'u8[8192]{0}', space=vmem, size = 0x2000, scoped, tag = 'output window, operand 0, single buffered']
    #allocation17 [shape = 'u8[8192]{0}', space=vmem, size = 0x2000, scoped, tag = 'output window, operand 1, single buffered']
    #allocation18 [shape = 's32[1]{0}', space=sflag, size = 0x4, scoped, tag = 'scoped memory for tpu_custom_call.1']
    #allocation19 [shape = 'u8[8192]{0}', space=vmem, size = 0x2000, scoped, tag = 'output window, operand 2, single buffered']
    %17 = vsyncpa [#allocation6], 0
    %18 = vsyncpa [#allocation9], 0
    %19 = vsyncpa [#allocation12], 0
    %20 = vsyncpa [#allocation15], 0
    %21 = vsyncpa [#allocation7], 0
    %22 = vsyncpa [#allocation18], 0
    // Predicated region
    $region2: #{tpu_custom_call.1} parent=1 // pred_check
      _
    $region3: #{tpu_custom_call.1} parent=1 // pred_check_branch
      %24 = sbr.rel (0) target = $region5
    $region4: #{tpu_custom_call.1} parent=1 // pred_region
      %s26 = ssub.s32 256, 256
      %27 = vsyncadd [#allocation6], %s26
      %s28 = sshll.u32 [#allocation5], 4
      %s29 = int_to_ptr.vmem [resolvable:$true] %s28
      %34 = dma.hbm_to_vmem [thread:$0]  %s0, 256, %s29, [#allocation6], 128, 128, 8
    $region5: #{tpu_custom_call.1} parent=1 // pred_fallthru
      _
    // Predicated region
    $region6: #{tpu_custom_call.1} parent=1 // pred_check
      _
    $region7: #{tpu_custom_call.1} parent=1 // pred_check_branch
      %36 = sbr.rel (0) target = $region9
    $region8: #{tpu_custom_call.1} parent=1 // pred_region
      %s38 = ssub.s32 256, 256
      %39 = vsyncadd [#allocation9], %s38
      %s40 = sshll.u32 [#allocation8], 4
      %s41 = int_to_ptr.vmem [resolvable:$true] %s40
      %46 = dma.hbm_to_vmem [thread:$0]  %s1, 256, %s41, [#allocation9], 128, 128, 8
    $region9: #{tpu_custom_call.1} parent=1 // pred_fallthru
      _
    // Predicated region
    $region10: #{tpu_custom_call.1} parent=1 // pred_check
      _
    $region11: #{tpu_custom_call.1} parent=1 // pred_check_branch
      %48 = sbr.rel (0) target = $region13
    $region12: #{tpu_custom_call.1} parent=1 // pred_region
      %s50 = ssub.s32 256, 256
      %51 = vsyncadd [#allocation9], %s50
      %s52 = sshll.u32 [#allocation10], 4
      %s53 = int_to_ptr.vmem [resolvable:$true] %s52
      %58 = dma.hbm_to_vmem [thread:$0]  %s2, 256, %s53, [#allocation9], 128, 128, 8
    $region13: #{tpu_custom_call.1} parent=1 // pred_fallthru
      _
    // Predicated region
    $region14: #{tpu_custom_call.1} parent=1 // pred_check
      _
    $region15: #{tpu_custom_call.1} parent=1 // pred_check_branch
      %60 = sbr.rel (0) target = $region17
    $region16: #{tpu_custom_call.1} parent=1 // pred_region
      %s62 = ssub.s32 512, 512
      %63 = vsyncadd [#allocation12], %s62
      %s64 = sshll.u32 [#allocation11], 4
      %s65 = int_to_ptr.vmem [resolvable:$true] %s64
      %70 = dma.hbm_to_vmem [thread:$0]  %s3, 512, %s65, [#allocation12], 128, 128, 8
    $region17: #{tpu_custom_call.1} parent=1 // pred_fallthru
      _
    // Predicated region
    $region18: #{tpu_custom_call.1} parent=1 // pred_check
      _
    $region19: #{tpu_custom_call.1} parent=1 // pred_check_branch
      %72 = sbr.rel (0) target = $region21
    $region20: #{tpu_custom_call.1} parent=1 // pred_region
      %s74 = ssub.s32 512, 512
      %75 = vsyncadd [#allocation12], %s74
      %s76 = sshll.u32 [#allocation13], 4
      %s77 = int_to_ptr.vmem [resolvable:$true] %s76
      %82 = dma.hbm_to_vmem [thread:$0]  %s4, 512, %s77, [#allocation12], 128, 128, 8
    $region21: #{tpu_custom_call.1} parent=1 // pred_fallthru
      _
    // Predicated region
    $region22: #{tpu_custom_call.1} parent=1 // pred_check
      _
    $region23: #{tpu_custom_call.1} parent=1 // pred_check_branch
      %84 = sbr.rel (0) target = $region25
    $region24: #{tpu_custom_call.1} parent=1 // pred_region
      %s86 = ssub.s32 512, 512
      %87 = vsyncadd [#allocation15], %s86
      %s88 = sshll.u32 [#allocation14], 4
      %s89 = int_to_ptr.vmem [resolvable:$true] %s88
      %94 = dma.hbm_to_vmem [thread:$0]  %s5, 512, %s89, [#allocation15], 128, 128, 8
    $region25: #{tpu_custom_call.1} parent=1 // pred_fallthru
      _
    // Predicated region
    $region26: #{tpu_custom_call.1} parent=1 // pred_check
      _
    $region27: #{tpu_custom_call.1} parent=1 // pred_check_branch
      %96 = sbr.rel (0) target = $region29
    $region28: #{tpu_custom_call.1} parent=1 // pred_region
      _
    $region29: #{tpu_custom_call.1} parent=1 // pred_fallthru
      _
    // Predicated region
    $region30: #{tpu_custom_call.1} parent=1 // pred_check
      _
    $region31: #{tpu_custom_call.1} parent=1 // pred_check_branch
      %98 = sbr.rel (0) target = $region33
    $region32: #{tpu_custom_call.1} parent=1 // pred_region
      _
    $region33: #{tpu_custom_call.1} parent=1 // pred_fallthru
      _
    // Predicated region
    $region34: #{tpu_custom_call.1} parent=1 // pred_check
      _
    $region35: #{tpu_custom_call.1} parent=1 // pred_check_branch
      %100 = sbr.rel (0) target = $region37
    $region36: #{tpu_custom_call.1} parent=1 // pred_region
      _
    $region37: #{tpu_custom_call.1} parent=1 // pred_fallthru
      _
    // Predicated region
    $region38: #{tpu_custom_call.1} parent=1 // pred_check
      _
    $region39: #{tpu_custom_call.1} parent=1 // pred_check_branch
      %102 = sbr.rel (0) target = $region41
    $region40: #{tpu_custom_call.1} parent=1 // pred_region
      %103 = dma.done [#allocation6], 256
    $region41: #{tpu_custom_call.1} parent=1 // pred_fallthru
      _
    // Predicated region
    $region42: #{tpu_custom_call.1} parent=1 // pred_check
      _
    $region43: #{tpu_custom_call.1} parent=1 // pred_check_branch
      %105 = sbr.rel (0) target = $region45
    $region44: #{tpu_custom_call.1} parent=1 // pred_region
      %106 = dma.done [#allocation9], 256
    $region45: #{tpu_custom_call.1} parent=1 // pred_fallthru
      _
    // Predicated region
    $region46: #{tpu_custom_call.1} parent=1 // pred_check
      _
    $region47: #{tpu_custom_call.1} parent=1 // pred_check_branch
      %108 = sbr.rel (0) target = $region49
    $region48: #{tpu_custom_call.1} parent=1 // pred_region
      %109 = dma.done [#allocation9], 256
    $region49: #{tpu_custom_call.1} parent=1 // pred_fallthru
      _
    // Predicated region
    $region50: #{tpu_custom_call.1} parent=1 // pred_check
      _
    $region51: #{tpu_custom_call.1} parent=1 // pred_check_branch
      %111 = sbr.rel (0) target = $region53
    $region52: #{tpu_custom_call.1} parent=1 // pred_region
      %112 = dma.done [#allocation12], 512
    $region53: #{tpu_custom_call.1} parent=1 // pred_fallthru
      _
    // Predicated region
    $region54: #{tpu_custom_call.1} parent=1 // pred_check
      _
    $region55: #{tpu_custom_call.1} parent=1 // pred_check_branch
      %114 = sbr.rel (0) target = $region57
    $region56: #{tpu_custom_call.1} parent=1 // pred_region
      %115 = dma.done [#allocation12], 512
    $region57: #{tpu_custom_call.1} parent=1 // pred_fallthru
      _
    // Predicated region
    $region58: #{tpu_custom_call.1} parent=1 // pred_check
      _
    $region59: #{tpu_custom_call.1} parent=1 // pred_check_branch
      %117 = sbr.rel (0) target = $region61
    $region60: #{tpu_custom_call.1} parent=1 // pred_region
      %118 = dma.done [#allocation15], 512
    $region61: #{tpu_custom_call.1} parent=1 // pred_fallthru
      _
    %p119 = scmp.eq.s32.totalorder 0, 0
    // Predicated region
    $region62: #{tpu_custom_call.1} parent=1 // pred_check
      %p120 = pneg %p119
    $region63: #{tpu_custom_call.1} parent=1 // pred_check_branch
      %122 = sbr.rel (%p120) target = $region65
    $region64: #{tpu_custom_call.1} parent=1 // pred_region
      %vm123 = vcmask 261120
      %124 = vst.msk [vmem:[#allocation2] sm:$0xff] %vm123, 0.0
      %125 = vst.msk [vmem:[#allocation2 + $0x8] sm:$0xff] %vm123, 0.0
      %126 = vst.msk [vmem:[#allocation3] sm:$0xff] %vm123, 0.0
      %127 = vst.msk [vmem:[#allocation3 + $0x8] sm:$0xff] %vm123, 0.0
      %128 = vst.msk [vmem:[#allocation4] sm:$0xff] %vm123, 0.0
      %129 = vst.msk [vmem:[#allocation4 + $0x8] sm:$0xff] %vm123, 0.0
    $region65: #{tpu_custom_call.1} parent=1 // pred_fallthru
      _
    %v130 = vld [vmem:[#allocation2] sm:$0xff]
    %v131 = vld [vmem:[#allocation2 + $0x8] sm:$0xff]
    %v132 = vld [vmem:[#allocation5] sm:$0xff]
    %v133 = vld [vmem:[#allocation5 + $0x8] sm:$0xff]
    %v134 = vld [vmem:[#allocation11] sm:$0xff]
    %v135 = vld [vmem:[#allocation11 + $0x8] sm:$0xff]
    %v136 = vld [vmem:[#allocation11 + $0x10] sm:$0xff]
    %v137 = vld [vmem:[#allocation11 + $0x18] sm:$0xff]
    %vm138 = vcmask 261120
    %v140 = vsel %vm138, %v132, 0
    %v143 = vsel %vm138, %v133, 0
    %145 = vmatprep.subr.mxu0 0.0
    %146 = vmatpush1.msra.mxu0 0.0
    %147 = vmatprep.subr.mxu0 0.0
    %148 = vmatpush1.msra.mxu0 0.0
    %149 = vmatprep.subr.mxu0 0.0
    %150 = vmatpush1.msra.mxu0 0.0
    %151 = vmatprep.subr.mxu0 0.0
    %152 = vmatpush1.msra.mxu0 0.0
    %153 = vmatprep.subr.mxu0 0.0
    %154 = vmatpush1.msra.mxu0 0.0
    %155 = vmatprep.subr.mxu0 0.0
    %156 = vmatpush1.msra.mxu0 0.0
    %157 = vmatprep.subr.mxu0 0.0
    %158 = vmatpush1.msra.mxu0 0.0
    %159 = vmatprep.subr.mxu0 0.0
    %160 = vmatpush1.msra.mxu0 0.0
    %161 = vmatprep.subr.mxu0 0.0
    %162 = vmatpush1.msra.mxu0 0.0
    %163 = vmatprep.subr.mxu0 0.0
    %164 = vmatpush1.msra.mxu0 0.0
    %165 = vmatprep.subr.mxu0 0.0
    %166 = vmatpush1.msra.mxu0 0.0
    %167 = vmatprep.subr.mxu0 0.0
    %168 = vmatpush1.msra.mxu0 0.0
    %169 = vmatprep.subr.mxu0 0.0
    %170 = vmatpush1.msra.mxu0 %v137
    %171 = vmatprep.subr.mxu0 0.0
    %172 = vmatpush1.msra.mxu0 %v136
    %173 = vmatprep.subr.mxu0 0.0
    %174 = vmatpush1.msra.mxu0 %v135
    %175 = vmatprep.subr.mxu0 0.0
    %176 = vmatpush1.msra.mxu0 %v134
    %177 = vmatprep.subr.mxu0 0.0
    %178 = vmatpush2.msra.mxu0 0.0
    %179 = vmatprep.subr.mxu0 0.0
    %180 = vmatpush2.msra.mxu0 0.0
    %181 = vmatprep.subr.mxu0 0.0
    %182 = vmatpush2.msra.mxu0 0.0
    %183 = vmatprep.subr.mxu0 0.0
    %184 = vmatpush2.msra.mxu0 0.0
    %185 = vmatprep.subr.mxu0 0.0
    %186 = vmatpush2.msra.mxu0 0.0
    %187 = vmatprep.subr.mxu0 0.0
    %188 = vmatpush2.msra.mxu0 0.0
    %189 = vmatprep.subr.mxu0 0.0
    %190 = vmatpush2.msra.mxu0 0.0
    %191 = vmatprep.subr.mxu0 0.0
    %192 = vmatpush2.msra.mxu0 0.0
    %193 = vmatprep.subr.mxu0 0.0
    %194 = vmatpush2.msra.mxu0 0.0
    %195 = vmatprep.subr.mxu0 0.0
    %196 = vmatpush2.msra.mxu0 0.0
    %197 = vmatprep.subr.mxu0 0.0
    %198 = vmatpush2.msra.mxu0 0.0
    %199 = vmatprep.subr.mxu0 0.0
    %200 = vmatpush2.msra.mxu0 0.0
    %201 = vmatprep.subr.mxu0 0.0
    %202 = vmatpush2.msra.mxu0 0.0
    %203 = vmatprep.subr.mxu0 0.0
    %204 = vmatpush2.msra.mxu0 0.0
    %205 = vmatprep.subr.mxu0 0.0
    %206 = vmatpush2.msra.mxu0 0.0
    %207 = vmatprep.subr.mxu0 0.0
    %208 = vmatpush2.msra.mxu0 0.0
    %209 = vmatprep.mubr.f32.mxu0 0.0
    %210 = vmatmul.mubr.f32.gmra.mxu0 %v140
    %v211 = vpop.f32.mrf.mxu0
    %v212 = vadd.f32 0.0, %v211
    %v213 = vpop.f32.mrf.mxu0
    %214 = vmatprep.mubr.f32.mxu0 0.0
    %215 = vmatmul.mubr.f32.gmra.mxu0 %v143
    %v216 = vpop.f32.mrf.mxu0
    %v217 = vadd.f32 0.0, %v216
    %v218 = vpop.f32.mrf.mxu0
    %219 = vdwg.mxu0
    %v220 = vadd.f32 %v130, %v212
    %v221 = vadd.f32 %v131, %v217
    %222 = vst.msk [vmem:[#allocation2] sm:$0xff] %vm138, %v220
    %223 = vst.msk [vmem:[#allocation2 + $0x8] sm:$0xff] %vm138, %v221
    %v224 = vld [vmem:[#allocation3] sm:$0xff]
    %v225 = vld [vmem:[#allocation3 + $0x8] sm:$0xff]
    %v226 = vld [vmem:[#allocation8] sm:$0xff]
    %v227 = vld [vmem:[#allocation8 + $0x8] sm:$0xff]
    %v228 = vld [vmem:[#allocation13] sm:$0xff]
    %v229 = vld [vmem:[#allocation13 + $0x8] sm:$0xff]
    %v230 = vld [vmem:[#allocation13 + $0x10] sm:$0xff]
    %v231 = vld [vmem:[#allocation13 + $0x18] sm:$0xff]
    %v233 = vsel %vm138, %v226, 0
    %v236 = vsel %vm138, %v227, 0
    %238 = vmatprep.subr.mxu0 0.0
    %239 = vmatpush1.msra.mxu0 0.0
    %240 = vmatprep.subr.mxu0 0.0
    %241 = vmatpush1.msra.mxu0 0.0
    %242 = vmatprep.subr.mxu0 0.0
    %243 = vmatpush1.msra.mxu0 0.0
    %244 = vmatprep.subr.mxu0 0.0
    %245 = vmatpush1.msra.mxu0 0.0
    %246 = vmatprep.subr.mxu0 0.0
    %247 = vmatpush1.msra.mxu0 0.0
    %248 = vmatprep.subr.mxu0 0.0
    %249 = vmatpush1.msra.mxu0 0.0
    %250 = vmatprep.subr.mxu0 0.0
    %251 = vmatpush1.msra.mxu0 0.0
    %252 = vmatprep.subr.mxu0 0.0
    %253 = vmatpush1.msra.mxu0 0.0
    %254 = vmatprep.subr.mxu0 0.0
    %255 = vmatpush1.msra.mxu0 0.0
    %256 = vmatprep.subr.mxu0 0.0
    %257 = vmatpush1.msra.mxu0 0.0
    %258 = vmatprep.subr.mxu0 0.0
    %259 = vmatpush1.msra.mxu0 0.0
    %260 = vmatprep.subr.mxu0 0.0
    %261 = vmatpush1.msra.mxu0 0.0
    %262 = vmatprep.subr.mxu0 0.0
    %263 = vmatpush1.msra.mxu0 %v231
    %264 = vmatprep.subr.mxu0 0.0
    %265 = vmatpush1.msra.mxu0 %v230
    %266 = vmatprep.subr.mxu0 0.0
    %267 = vmatpush1.msra.mxu0 %v229
    %268 = vmatprep.subr.mxu0 0.0
    %269 = vmatpush1.msra.mxu0 %v228
    %270 = vmatprep.subr.mxu0 0.0
    %271 = vmatpush2.msra.mxu0 0.0
    %272 = vmatprep.subr.mxu0 0.0
    %273 = vmatpush2.msra.mxu0 0.0
    %274 = vmatprep.subr.mxu0 0.0
    %275 = vmatpush2.msra.mxu0 0.0
    %276 = vmatprep.subr.mxu0 0.0
    %277 = vmatpush2.msra.mxu0 0.0
    %278 = vmatprep.subr.mxu0 0.0
    %279 = vmatpush2.msra.mxu0 0.0
    %280 = vmatprep.subr.mxu0 0.0
    %281 = vmatpush2.msra.mxu0 0.0
    %282 = vmatprep.subr.mxu0 0.0
    %283 = vmatpush2.msra.mxu0 0.0
    %284 = vmatprep.subr.mxu0 0.0
    %285 = vmatpush2.msra.mxu0 0.0
    %286 = vmatprep.subr.mxu0 0.0
    %287 = vmatpush2.msra.mxu0 0.0
    %288 = vmatprep.subr.mxu0 0.0
    %289 = vmatpush2.msra.mxu0 0.0
    %290 = vmatprep.subr.mxu0 0.0
    %291 = vmatpush2.msra.mxu0 0.0
    %292 = vmatprep.subr.mxu0 0.0
    %293 = vmatpush2.msra.mxu0 0.0
    %294 = vmatprep.subr.mxu0 0.0
    %295 = vmatpush2.msra.mxu0 0.0
    %296 = vmatprep.subr.mxu0 0.0
    %297 = vmatpush2.msra.mxu0 0.0
    %298 = vmatprep.subr.mxu0 0.0
    %299 = vmatpush2.msra.mxu0 0.0
    %300 = vmatprep.subr.mxu0 0.0
    %301 = vmatpush2.msra.mxu0 0.0
    %302 = vmatprep.mubr.f32.mxu0 0.0
    %303 = vmatmul.mubr.f32.gmra.mxu0 %v233
    %v304 = vpop.f32.mrf.mxu0
    %v305 = vadd.f32 0.0, %v304
    %v306 = vpop.f32.mrf.mxu0
    %307 = vmatprep.mubr.f32.mxu0 0.0
    %308 = vmatmul.mubr.f32.gmra.mxu0 %v236
    %v309 = vpop.f32.mrf.mxu0
    %v310 = vadd.f32 0.0, %v309
    %v311 = vpop.f32.mrf.mxu0
    %312 = vdwg.mxu0
    %v313 = vadd.f32 %v224, %v305
    %v314 = vadd.f32 %v225, %v310
    %315 = vst.msk [vmem:[#allocation3] sm:$0xff] %vm138, %v313
    %316 = vst.msk [vmem:[#allocation3 + $0x8] sm:$0xff] %vm138, %v314
    %v317 = vld [vmem:[#allocation4] sm:$0xff]
    %v318 = vld [vmem:[#allocation4 + $0x8] sm:$0xff]
    %v319 = vld [vmem:[#allocation10] sm:$0xff]
    %v320 = vld [vmem:[#allocation10 + $0x8] sm:$0xff]
    %v321 = vld [vmem:[#allocation14] sm:$0xff]
    %v322 = vld [vmem:[#allocation14 + $0x8] sm:$0xff]
    %v323 = vld [vmem:[#allocation14 + $0x10] sm:$0xff]
    %v324 = vld [vmem:[#allocation14 + $0x18] sm:$0xff]
    %v326 = vsel %vm138, %v319, 0
    %v329 = vsel %vm138, %v320, 0
    %331 = vmatprep.subr.mxu0 0.0
    %332 = vmatpush1.msra.mxu0 0.0
    %333 = vmatprep.subr.mxu0 0.0
    %334 = vmatpush1.msra.mxu0 0.0
    %335 = vmatprep.subr.mxu0 0.0
    %336 = vmatpush1.msra.mxu0 0.0
    %337 = vmatprep.subr.mxu0 0.0
    %338 = vmatpush1.msra.mxu0 0.0
    %339 = vmatprep.subr.mxu0 0.0
    %340 = vmatpush1.msra.mxu0 0.0
    %341 = vmatprep.subr.mxu0 0.0
    %342 = vmatpush1.msra.mxu0 0.0
    %343 = vmatprep.subr.mxu0 0.0
    %344 = vmatpush1.msra.mxu0 0.0
    %345 = vmatprep.subr.mxu0 0.0
    %346 = vmatpush1.msra.mxu0 0.0
    %347 = vmatprep.subr.mxu0 0.0
    %348 = vmatpush1.msra.mxu0 0.0
    %349 = vmatprep.subr.mxu0 0.0
    %350 = vmatpush1.msra.mxu0 0.0
    %351 = vmatprep.subr.mxu0 0.0
    %352 = vmatpush1.msra.mxu0 0.0
    %353 = vmatprep.subr.mxu0 0.0
    %354 = vmatpush1.msra.mxu0 0.0
    %355 = vmatprep.subr.mxu0 0.0
    %356 = vmatpush1.msra.mxu0 %v324
    %357 = vmatprep.subr.mxu0 0.0
    %358 = vmatpush1.msra.mxu0 %v323
    %359 = vmatprep.subr.mxu0 0.0
    %360 = vmatpush1.msra.mxu0 %v322
    %361 = vmatprep.subr.mxu0 0.0
    %362 = vmatpush1.msra.mxu0 %v321
    %363 = vmatprep.subr.mxu0 0.0
    %364 = vmatpush2.msra.mxu0 0.0
    %365 = vmatprep.subr.mxu0 0.0
    %366 = vmatpush2.msra.mxu0 0.0
    %367 = vmatprep.subr.mxu0 0.0
    %368 = vmatpush2.msra.mxu0 0.0
    %369 = vmatprep.subr.mxu0 0.0
    %370 = vmatpush2.msra.mxu0 0.0
    %371 = vmatprep.subr.mxu0 0.0
    %372 = vmatpush2.msra.mxu0 0.0
    %373 = vmatprep.subr.mxu0 0.0
    %374 = vmatpush2.msra.mxu0 0.0
    %375 = vmatprep.subr.mxu0 0.0
    %376 = vmatpush2.msra.mxu0 0.0
    %377 = vmatprep.subr.mxu0 0.0
    %378 = vmatpush2.msra.mxu0 0.0
    %379 = vmatprep.subr.mxu0 0.0
    %380 = vmatpush2.msra.mxu0 0.0
    %381 = vmatprep.subr.mxu0 0.0
    %382 = vmatpush2.msra.mxu0 0.0
    %383 = vmatprep.subr.mxu0 0.0
    %384 = vmatpush2.msra.mxu0 0.0
    %385 = vmatprep.subr.mxu0 0.0
    %386 = vmatpush2.msra.mxu0 0.0
    %387 = vmatprep.subr.mxu0 0.0
    %388 = vmatpush2.msra.mxu0 0.0
    %389 = vmatprep.subr.mxu0 0.0
    %390 = vmatpush2.msra.mxu0 0.0
    %391 = vmatprep.subr.mxu0 0.0
    %392 = vmatpush2.msra.mxu0 0.0
    %393 = vmatprep.subr.mxu0 0.0
    %394 = vmatpush2.msra.mxu0 0.0
    %395 = vmatprep.mubr.f32.mxu0 0.0
    %396 = vmatmul.mubr.f32.gmra.mxu0 %v326
    %v397 = vpop.f32.mrf.mxu0
    %v398 = vadd.f32 0.0, %v397
    %v399 = vpop.f32.mrf.mxu0
    %400 = vmatprep.mubr.f32.mxu0 0.0
    %401 = vmatmul.mubr.f32.gmra.mxu0 %v329
    %v402 = vpop.f32.mrf.mxu0
    %v403 = vadd.f32 0.0, %v402
    %v404 = vpop.f32.mrf.mxu0
    %405 = vdwg.mxu0
    %v406 = vadd.f32 %v317, %v398
    %v407 = vadd.f32 %v318, %v403
    %408 = vst.msk [vmem:[#allocation4] sm:$0xff] %vm138, %v406
    %409 = vst.msk [vmem:[#allocation4 + $0x8] sm:$0xff] %vm138, %v407
    // Predicated region
    $region66: #{tpu_custom_call.1} parent=1 // pred_check
      %p410 = pneg %p119
    $region67: #{tpu_custom_call.1} parent=1 // pred_check_branch
      %412 = sbr.rel (%p410) target = $region69
    $region68: #{tpu_custom_call.1} parent=1 // pred_region
      %v413 = vld [vmem:[#allocation2] sm:$0xff]
      %v414 = vld [vmem:[#allocation2 + $0x8] sm:$0xff]
      %v415 = vld [vmem:[%s6] sm:$0x1]
      %v417 = vlaneseq
      %v418 = vshrl.u32 %v417, 7
      %v419 = vsub.s32 0, %v418
      %v420 = vrot.slane %v415, %v419
      %v422 = vadd.f32 %v413, %v420
      %v423 = vadd.f32 %v414, %v420
      %424 = vst.msk [vmem:[#allocation16] sm:$0xff] %vm138, %v422
      %425 = vst.msk [vmem:[#allocation16 + $0x8] sm:$0xff] %vm138, %v423
      %v426 = vld [vmem:[#allocation3] sm:$0xff]
      %v427 = vld [vmem:[#allocation3 + $0x8] sm:$0xff]
      %v428 = vld [vmem:[%s7] sm:$0x1]
      %v430 = vlaneseq
      %v431 = vshrl.u32 %v430, 7
      %v432 = vsub.s32 0, %v431
      %v433 = vrot.slane %v428, %v432
      %v435 = vadd.f32 %v426, %v433
      %v436 = vadd.f32 %v427, %v433
      %437 = vst.msk [vmem:[#allocation17] sm:$0xff] %vm138, %v435
      %438 = vst.msk [vmem:[#allocation17 + $0x8] sm:$0xff] %vm138, %v436
      %v439 = vld [vmem:[#allocation4] sm:$0xff]
      %v440 = vld [vmem:[#allocation4 + $0x8] sm:$0xff]
      %v441 = vld [vmem:[%s8] sm:$0x1]
      %v443 = vlaneseq
      %v444 = vshrl.u32 %v443, 7
      %v445 = vsub.s32 0, %v444
      %v446 = vrot.slane %v441, %v445
      %v448 = vadd.f32 %v439, %v446
      %v449 = vadd.f32 %v440, %v446
      %450 = vst.msk [vmem:[#allocation19] sm:$0xff] %vm138, %v448
      %451 = vst.msk [vmem:[#allocation19 + $0x8] sm:$0xff] %vm138, %v449
    $region69: #{tpu_custom_call.1} parent=1 // pred_fallthru
      _
    // Predicated region
    $region70: #{tpu_custom_call.1} parent=1 // pred_check
      _
    $region71: #{tpu_custom_call.1} parent=1 // pred_check_branch
      %453 = sbr.rel (0) target = $region73
    $region72: #{tpu_custom_call.1} parent=1 // pred_region
      %s455 = ssub.s32 256, 256
      %456 = vsyncadd [#allocation7], %s455
      %s457 = sshll.u32 [#allocation16], 4
      %s458 = int_to_ptr.vmem [resolvable:$true] %s457
      %463 = dma.vmem_to_hbm [thread:$0]  %s458, 256, %s9, [#allocation7], 128, 128, 8
    $region73: #{tpu_custom_call.1} parent=1 // pred_fallthru
      _
    // Predicated region
    $region74: #{tpu_custom_call.1} parent=1 // pred_check
      _
    $region75: #{tpu_custom_call.1} parent=1 // pred_check_branch
      %465 = sbr.rel (0) target = $region77
    $region76: #{tpu_custom_call.1} parent=1 // pred_region
      %s467 = ssub.s32 256, 256
      %468 = vsyncadd [#allocation18], %s467
      %s469 = sshll.u32 [#allocation17], 4
      %s470 = int_to_ptr.vmem [resolvable:$true] %s469
      %475 = dma.vmem_to_hbm [thread:$0]  %s470, 256, %s10, [#allocation18], 128, 128, 8
    $region77: #{tpu_custom_call.1} parent=1 // pred_fallthru
      _
    // Predicated region
    $region78: #{tpu_custom_call.1} parent=1 // pred_check
      _
    $region79: #{tpu_custom_call.1} parent=1 // pred_check_branch
      %477 = sbr.rel (0) target = $region81
    $region80: #{tpu_custom_call.1} parent=1 // pred_region
      %s479 = ssub.s32 256, 256
      %480 = vsyncadd [#allocation18], %s479
      %s481 = sshll.u32 [#allocation19], 4
      %s482 = int_to_ptr.vmem [resolvable:$true] %s481
      %487 = dma.vmem_to_hbm [thread:$0]  %s482, 256, %s11, [#allocation18], 128, 128, 8
    $region81: #{tpu_custom_call.1} parent=1 // pred_fallthru
      _
    // Predicated region
    $region82: #{tpu_custom_call.1} parent=1 // pred_check
      _
    $region83: #{tpu_custom_call.1} parent=1 // pred_check_branch
      %489 = sbr.rel (0) target = $region85
    $region84: #{tpu_custom_call.1} parent=1 // pred_region
      %490 = dma.done [#allocation7], 256
    $region85: #{tpu_custom_call.1} parent=1 // pred_fallthru
      _
    // Predicated region
    $region86: #{tpu_custom_call.1} parent=1 // pred_check
      _
    $region87: #{tpu_custom_call.1} parent=1 // pred_check_branch
      %492 = sbr.rel (0) target = $region89
    $region88: #{tpu_custom_call.1} parent=1 // pred_region
      %493 = dma.done [#allocation18], 256
    $region89: #{tpu_custom_call.1} parent=1 // pred_fallthru
      _
    // Predicated region
    $region90: #{tpu_custom_call.1} parent=1 // pred_check
      _
    $region91: #{tpu_custom_call.1} parent=1 // pred_check_branch
      %495 = sbr.rel (0) target = $region93
    $region92: #{tpu_custom_call.1} parent=1 // pred_region
      %496 = dma.done [#allocation18], 256
    $region93: #{tpu_custom_call.1} parent=1 // pred_fallthru
      _
    %497 = vsyncpa [#allocation6], 1
    %498 = vsyncpa [#allocation9], 1
    %499 = vsyncpa [#allocation12], 1
    %500 = vsyncpa [#allocation15], 1
    %501 = vsyncpa [#allocation7], 1
    %502 = vsyncpa [#allocation18], 1

</llo_original>
